<compile_context>
chip_gen: v5e
topology: v5e:2x2
jax: 0.10.0
libtpu: 0.0.40
codegen_flags: <defaults>
</compile_context>

<pallas_src>
import functools

import jax
import jax.numpy as jnp
from jax.experimental import pallas as pl
from jax.experimental.pallas import tpu as pltpu


def _gelu(x):
    # torch.nn.functional.gelu default == exact (erf-based) gelu
    return jax.nn.gelu(x, approximate=False)


# ----------------------------------------------------------------------------
# Per-sequence fused K|V projection kernel (runs once per source sequence;
# amortized over the decode loop).  Row-tiled over B*S, one matmul.
# ----------------------------------------------------------------------------
def kv_project_kernel(enc_ref, wkv_ref, bkv_ref, kv_ref):
    kv = (jnp.dot(enc_ref[...], wkv_ref[...], preferred_element_type=jnp.float32)
          + bkv_ref[...])
    kv_ref[...] = kv.astype(jnp.bfloat16)


# ----------------------------------------------------------------------------
# Fused decode-step kernel, grid-tiled over LSTM layers.
#   grid step l: one LSTM layer (per-layer weight blocks streamed in);
#   l == 0    : input-feeding FC feeding the layer-input carry scratch;
#   l == L-1  : multi-head cross-attention (K/V precomputed, head-major)
#               + attentional FC.
# ----------------------------------------------------------------------------
def decoder1_step_kernel(
        emb_ref, prev_ref, h_ref, c_ref, k_ref, v_ref, negb_ref,
        wif_prev_ref, wif_emb_ref, bif_ref,
        wih_ref, whh_ref, blstm_ref,
        wq_ref, bq_ref, wo_ref, bo_ref,
        wa_attn_ref, wa_out_ref, ba_ref,
        h_out_ref, c_out_ref, attnw_ref, av_ref,
        x_carry,
        *, num_heads):
    l = pl.program_id(0)
    n_layers = pl.num_programs(0)
    _, B, H = h_ref.shape
    nh = num_heads
    hd = H // nh
    S = negb_ref.shape[-1]
    bf16 = jnp.bfloat16

    # ---------- input feeding (layer 0 only): gelu(Linear([prev_attn; emb])) ----------
    @pl.when(l == 0)
    def _():
        x = (jnp.dot(prev_ref[...].astype(bf16), wif_prev_ref[...],
                     preferred_element_type=jnp.float32)
             + jnp.dot(emb_ref[...].astype(bf16), wif_emb_ref[...],
                       preferred_element_type=jnp.float32)
             + bif_ref[...])
        x_carry[...] = _gelu(x)
        # input_feeding_fc_dropout is identity in eval mode.

    # ---------- one stacked-LSTM layer per grid step (torch gate order i,f,g,o) ----------
    h_prev = h_ref[0]                                                  # [B, H] f32
    c_prev = c_ref[0]
    x_in = x_carry[...]                                                # [B, E] f32
    gates = (jnp.dot(x_in.astype(bf16), wih_ref[0],
                     preferred_element_type=jnp.float32)
             + jnp.dot(h_prev.astype(bf16), whh_ref[0],
                       preferred_element_type=jnp.float32)
             + blstm_ref[0])                                           # [B, 4H] f32
    i_g = jax.nn.sigmoid(gates[:, 0 * H:1 * H])
    f_g = jax.nn.sigmoid(gates[:, 1 * H:2 * H])
    g_g = jnp.tanh(gates[:, 2 * H:3 * H])
    o_g = jax.nn.sigmoid(gates[:, 3 * H:4 * H])
    c_new = f_g * c_prev + i_g * g_g
    h_new = o_g * jnp.tanh(c_new)
    h_out_ref[0] = h_new
    c_out_ref[0] = c_new
    x_carry[...] = h_new        # inter-layer rnn dropout is identity in eval mode

    # ---------- attention + attentional FC (last layer only) ----------
    @pl.when(l == n_layers - 1)
    def _():
        output = h_new                                                 # [B, H] f32
        out_b = output.astype(bf16)
        negb = negb_ref[...]                                           # [B,1,S] hoisted

        # single full-width q projection (1/sqrt(hd) folded into Wq/bq)
        q_all = (jnp.dot(out_b, wq_ref[...], preferred_element_type=jnp.float32)
                 + bq_ref[...])                                        # [B, H] f32
        probs_acc = jnp.zeros((B, 1, S), jnp.float32)
        ctx_heads = []
        for h in range(nh):
            q3 = q_all[:, h * hd:(h + 1) * hd][:, None, :].astype(bf16)  # [B,1,hd]
            sc = jnp.einsum('bqd,bkd->bqk', q3, k_ref[h],
                            preferred_element_type=jnp.float32) + negb   # [B,1,S]
            sc = sc - jnp.max(sc, axis=-1, keepdims=True)
            e = jnp.exp(sc)
            p = e * pl.reciprocal(jnp.sum(e, axis=-1, keepdims=True), approx=True)
            probs_acc = probs_acc + p
            ctx = jnp.einsum('bqk,bkd->bqd', p.astype(bf16), v_ref[h],
                             preferred_element_type=jnp.float32)         # [B,1,hd]
            ctx_heads.append(ctx.reshape(B, hd))
        # single full-width out-projection on the concatenated head contexts
        ctx_cat = jnp.concatenate(ctx_heads, axis=-1).astype(bf16)       # [B, H]
        attn_out = (jnp.dot(ctx_cat, wo_ref[...],
                            preferred_element_type=jnp.float32)
                    + bo_ref[...])                                       # [B, H] f32
        # attention dropout is identity in eval mode; average_attn_weights=True:
        attnw_ref[...] = probs_acc * jnp.float32(1.0 / nh)

        # attentional vector: gelu(Linear([attn_out; output])) as two split dots
        av = (jnp.dot(attn_out.astype(bf16), wa_attn_ref[...],
                      preferred_element_type=jnp.float32)
              + jnp.dot(out_b, wa_out_ref[...], preferred_element_type=jnp.float32)
              + ba_ref[...])                                             # [B, A]
        av_ref[...] = _gelu(av)


# ----------------------------------------------------------------------------
# Logits FC, tiled over the (padded) vocab axis.
# ----------------------------------------------------------------------------
def logits_kernel(av_ref, wl_ref, bl_ref, out_ref):
    out_ref[...] = (jnp.dot(av_ref[...].astype(jnp.bfloat16), wl_ref[...],
                            preferred_element_type=jnp.float32) + bl_ref[...])


# ----------------------------------------------------------------------------
# Small sizing helpers
# ----------------------------------------------------------------------------
def _nb(x):
    return int(x.size) * x.dtype.itemsize


def _nbs(shape, dtype):
    n = 1
    for d in shape:
        n *= int(d)
    return n * jnp.dtype(dtype).itemsize


def _vmem_limit(nbytes):
    # explicit scoped-VMEM request: footprint * 1.5 + headroom, clamped to
    # [32 MiB (v6e/v7x default), 128 MiB (physical on v5e/v6e)].
    return int(min(128 << 20, max(32 << 20, int(nbytes * 1.5) + (4 << 20))))


def _pick_row_tile(n):
    if n <= 1024:
        return n
    for t in (1024, 512, 256, 128, 64, 32, 16, 8):
        if n % t == 0:
            return t
    # TODO(synk): pad ragged B*S instead of falling back to a single block.
    return n


def _pick_v_tile(v_pad):
    for t in (4096, 2048, 1024, 512):
        if v_pad % t == 0:
            return t
    return v_pad   # unreachable: v_pad is always a multiple of 512


# ----------------------------------------------------------------------------
# Parameter preparation: torch layout (out_features, in_features) ->
# kernel layout (pre-transposed, split, fused K|V, scale-folded, bf16 weights,
# vocab padded to a multiple of 512).
# ----------------------------------------------------------------------------
def prepare_params(p, *, num_heads):
    bf16 = jnp.bfloat16
    H = p["wq"].shape[0]
    A = p["wa"].shape[0]
    E = p["wif"].shape[0]
    V = p["wl"].shape[0]
    hd = H // num_heads
    scale = jnp.float32(1.0 / (hd ** 0.5))

    wif_t = p["wif"].T                                   # [A+E, E]
    wih_t = jnp.transpose(p["wih"], (0, 2, 1))           # [L, E, 4H]
    whh_t = jnp.transpose(p["whh"], (0, 2, 1))           # [L, H, 4H]

    wkv = jnp.concatenate([p["wk"].T, p["wv"].T], axis=1)    # [H, 2H]
    bkv = jnp.concatenate([p["bk"], p["bv"]], axis=1)        # [1, 2H]

    wa_t = p["wa"].T                                     # [2H, A]

    # pad vocab up to a multiple of 512 so logits FC stays tiled + lane-dense
    V_pad = ((V + 511) // 512) * 512
    wl_pad = jnp.pad(p["wl"].T, ((0, 0), (0, V_pad - V)))    # [A, V_pad]
    bl_pad = jnp.pad(p["bl"], ((0, 0), (0, V_pad - V)))      # [1, V_pad]

    return dict(
        wif_prev=wif_t[:A].astype(bf16), wif_emb=wif_t[A:].astype(bf16),
        bif=p["bif"],
        wih=wih_t.astype(bf16), whh=whh_t.astype(bf16), blstm=p["blstm"],
        wq=(p["wq"].T * scale).astype(bf16), bq=p["bq"] * scale,
        wkv=wkv.astype(bf16), bkv=bkv,
        wo=p["wo"].T.astype(bf16), bo=p["bo"],
        wa_attn=wa_t[:H].astype(bf16), wa_out=wa_t[H:].astype(bf16), ba=p["ba"],
        wl=wl_pad.astype(bf16), bl=bl_pad, vocab_size=V,
    )


def decoder1_forward(kparams, embedded, hidden, cell, padded_encoder_outputs,
                     attention_key_padding_masks, prev_attentional_vectors,
                     *, num_layers, hidden_dim, num_heads):
    f32, bf16 = jnp.float32, jnp.bfloat16
    B, _, E = embedded.shape
    L = num_layers
    H = hidden_dim
    S = padded_encoder_outputs.shape[1]
    A = prev_attentional_vectors.shape[2]
    V = kparams["vocab_size"]
    V_pad = kparams["wl"].shape[1]
    nh = num_heads
    hd = H // nh
    assert E == H, "stacked LSTM weight layout assumes embedding_dim == hidden_dim"

    emb2 = embedded.reshape(B, E).astype(f32)
    prev2 = prev_attentional_vectors.reshape(B, A).astype(f32)
    hidden = hidden.astype(f32)
    cell = cell.astype(f32)

    # ---- per-sequence fused K|V projection (row-tiled, megacore-parallel) ----
    BS = B * S
    tr = _pick_row_tile(BS)
    enc2 = padded_encoder_outputs.reshape(BS, H).astype(bf16)
    kv_limit = _vmem_limit(
        2 * (_nbs((tr, H), bf16) + _nbs((tr, 2 * H), bf16))
        + _nb(kparams["wkv"]) + _nb(kparams["bkv"]))
    kv_flat = pl.pallas_call(
        kv_project_kernel,
        out_shape=jax.ShapeDtypeStruct((BS, 2 * H), bf16),
        grid=(BS // tr,),
        in_specs=[
            pl.BlockSpec((tr, H), lambda i: (i, 0)),
            pl.BlockSpec((H, 2 * H), lambda i: (0, 0)),
            pl.BlockSpec((1, 2 * H), lambda i: (0, 0)),
        ],
        out_specs=pl.BlockSpec((tr, 2 * H), lambda i: (i, 0)),
        compiler_params=pltpu.CompilerParams(
            dimension_semantics=("parallel",), vmem_limit_bytes=kv_limit),
    )(enc2, kparams["wkv"], kparams["bkv"])

    # Head-major K/V staging (one-time layout plumbing per source sequence).
    # TODO(synk): when head_dim >= 128, write head-major K/V directly from the
    # kv kernel (grid over heads) to avoid this extra HBM round trip.
    k_heads = kv_flat[:, :H].reshape(B, S, nh, hd).transpose(2, 0, 1, 3)
    v_heads = kv_flat[:, H:].reshape(B, S, nh, hd).transpose(2, 0, 1, 3)

    # Additive key-padding bias (torch uses -inf; -1e30 gives the same softmax
    # provided every row has at least one valid key).
    negbias = jnp.where(attention_key_padding_masks,
                        jnp.float32(-1e30), jnp.float32(0.0))[:, None, :]

    kernel = functools.partial(decoder1_step_kernel, num_heads=num_heads)

    const_in = (emb2, prev2, k_heads, v_heads, negbias,
                kparams["wif_prev"], kparams["wif_emb"], kparams["bif"],
                kparams["wq"], kparams["bq"], kparams["wo"], kparams["bo"],
                kparams["wa_attn"], kparams["wa_out"], kparams["ba"])
    step_need = (sum(_nb(x) for x in const_in)
                 + 2 * (4 * _nbs((1, B, H), f32)              # h/c in + out tiles
                        + _nbs((1, E, 4 * H), bf16)           # wih layer tile
                        + _nbs((1, H, 4 * H), bf16)           # whh layer tile
                        + _nbs((1, 1, 4 * H), f32))           # blstm layer tile
                 + _nbs((B, 1, S), f32) + _nbs((B, A), f32)   # attnw / av outputs
                 + _nbs((B, H), f32))                         # x_carry scratch
    step_limit = _vmem_limit(step_need)

    def full(rank):
        return lambda l: (0,) * rank

    h_out, c_out, attn_w, av = pl.pallas_call(
        kernel,
        out_shape=(
            jax.ShapeDtypeStruct((L, B, H), f32),    # hidden
            jax.ShapeDtypeStruct((L, B, H), f32),    # cell
            jax.ShapeDtypeStruct((B, 1, S), f32),    # attn weights (head-avg)
            jax.ShapeDtypeStruct((B, A), f32),       # attentional vectors
        ),
        grid=(L,),
        in_specs=[
            pl.BlockSpec((B, E), full(2)),                     # embedded
            pl.BlockSpec((B, A), full(2)),                     # prev attentional
            pl.BlockSpec((1, B, H), lambda l: (l, 0, 0)),      # hidden (per layer)
            pl.BlockSpec((1, B, H), lambda l: (l, 0, 0)),      # cell (per layer)
            pl.BlockSpec((nh, B, S, hd), full(4)),             # K head-major
            pl.BlockSpec((nh, B, S, hd), full(4)),             # V head-major
            pl.BlockSpec((B, 1, S), full(3)),                  # key-padding bias
            pl.BlockSpec((A, E), full(2)),                     # wif_prev
            pl.BlockSpec((E, E), full(2)),                     # wif_emb
            pl.BlockSpec((1, E), full(2)),                     # bif
            pl.BlockSpec((1, E, 4 * H), lambda l: (l, 0, 0)),  # wih (layer-tiled)
            pl.BlockSpec((1, H, 4 * H), lambda l: (l, 0, 0)),  # whh (layer-tiled)
            pl.BlockSpec((1, 1, 4 * H), lambda l: (l, 0, 0)),  # blstm (layer-tiled)
            pl.BlockSpec((H, H), full(2)),                     # wq (scale folded)
            pl.BlockSpec((1, H), full(2)),                     # bq (scale folded)
            pl.BlockSpec((H, H), full(2)),                     # wo
            pl.BlockSpec((1, H), full(2)),                     # bo
            pl.BlockSpec((H, A), full(2)),                     # wa_attn
            pl.BlockSpec((H, A), full(2)),                     # wa_out
            pl.BlockSpec((1, A), full(2)),                     # ba
        ],
        out_specs=(
            pl.BlockSpec((1, B, H), lambda l: (l, 0, 0)),
            pl.BlockSpec((1, B, H), lambda l: (l, 0, 0)),
            pl.BlockSpec((B, 1, S), full(3)),
            pl.BlockSpec((B, A), full(2)),
        ),
        scratch_shapes=[pltpu.VMEM((B, H), f32)],
        compiler_params=pltpu.CompilerParams(
            dimension_semantics=("arbitrary",), vmem_limit_bytes=step_limit),
    )(emb2, prev2, hidden, cell, k_heads, v_heads, negbias,
      kparams["wif_prev"], kparams["wif_emb"], kparams["bif"],
      kparams["wih"], kparams["whh"], kparams["blstm"],
      kparams["wq"], kparams["bq"], kparams["wo"], kparams["bo"],
      kparams["wa_attn"], kparams["wa_out"], kparams["ba"])

    # ---- vocab-tiled logits FC over the padded vocab ----
    tv = _pick_v_tile(V_pad)
    lg_limit = _vmem_limit(
        2 * (_nbs((B, A), f32) + _nbs((A, tv), bf16) + _nbs((1, tv), f32)
             + _nbs((B, tv), f32)))
    logits_pad = pl.pallas_call(
        logits_kernel,
        out_shape=jax.ShapeDtypeStruct((B, V_pad), f32),
        grid=(V_pad // tv,),
        in_specs=[
            pl.BlockSpec((B, A), lambda j: (0, 0)),
            pl.BlockSpec((A, tv), lambda j: (0, j)),
            pl.BlockSpec((1, tv), lambda j: (0, j)),
        ],
        out_specs=pl.BlockSpec((B, tv), lambda j: (0, j)),
        compiler_params=pltpu.CompilerParams(
            dimension_semantics=("parallel",), vmem_limit_bytes=lg_limit),
    )(av, kparams["wl"], kparams["bl"])
    logits = logits_pad[:, :V]

    return (h_out, c_out, attn_w,
            av.reshape(B, 1, A),
            logits.reshape(B, 1, V))


def init_params(key, *, E, H, L, A, V):
    ks = jax.random.split(key, 16)

    def w(k, shape, scale=0.1):
        return jax.random.normal(k, shape, dtype=jnp.float32) * scale

    assert E == H, "stacked LSTM weight layout here assumes embedding_dim == hidden_dim"
    return dict(
        # input_feeding_fc: Linear(A + E -> E)
        wif=w(ks[0], (E, A + E)), bif=w(ks[1], (1, E), 0.01),
        # LSTM (stacked layers)
        wih=w(ks[2], (L, 4 * H, H)), whh=w(ks[3], (L, 4 * H, H)),
        blstm=w(ks[4], (L, 1, 4 * H), 0.01),                 # b_ih + b_hh combined
        # MultiheadAttention in_proj (q/k/v) and out_proj
        wq=w(ks[5], (H, H)), bq=w(ks[6], (1, H), 0.01),
        wk=w(ks[7], (H, H)), bk=w(ks[8], (1, H), 0.01),
        wv=w(ks[9], (H, H)), bv=w(ks[10], (1, H), 0.01),
        wo=w(ks[11], (H, H)), bo=w(ks[12], (1, H), 0.01),
        # attentional_fc: Linear(2H -> A)
        wa=w(ks[13], (A, 2 * H)), ba=w(ks[14], (1, A), 0.01),
        # logits_fc: Linear(A -> V)
        wl=w(ks[15], (V, A)), bl=jnp.zeros((1, V), jnp.float32),
    )


if __name__ == "__main__":
    B, E, H, L, NH, S, A, V = 2, 32, 32, 2, 4, 8, 32, 64

    key = jax.random.PRNGKey(0)
    k_p, k_e, k_h, k_c, k_enc, k_prev = jax.random.split(key, 6)

    torch_params = init_params(k_p, E=E, H=H, L=L, A=A, V=V)
    kparams = prepare_params(torch_params, num_heads=NH)

    embedded = jax.random.normal(k_e, (B, 1, E), jnp.float32)
    hidden = jax.random.normal(k_h, (L, B, H), jnp.float32)
    cell = jax.random.normal(k_c, (L, B, H), jnp.float32)
    padded_encoder_outputs = jax.random.normal(k_enc, (B, S, H), jnp.float32)
    # sequence lengths [8, 5] -> True at padded key positions
    lengths = jnp.array([S, 5], dtype=jnp.int32)
    attention_key_padding_masks = jnp.arange(S)[None, :] >= lengths[:, None]
    prev_attentional_vectors = jax.random.normal(k_prev, (B, 1, A), jnp.float32)

    outs = decoder1_forward(
        kparams, embedded, hidden, cell, padded_encoder_outputs,
        attention_key_padding_masks, prev_attentional_vectors,
        num_layers=L, hidden_dim=H, num_heads=NH)
    jax.block_until_ready(outs)

    h_out, c_out, attn_w, attnl, logits = outs
    assert h_out.shape == (L, B, H)
    assert c_out.shape == (L, B, H)
    assert attn_w.shape == (B, 1, S)
    assert attnl.shape == (B, 1, A)
    assert logits.shape == (B, 1, V)
    assert bool(jnp.all(jnp.isfinite(logits)))
    assert bool(jnp.all(jnp.isfinite(attn_w)))
    # attention weights over padded keys must be ~0 and rows sum to ~1
    assert bool(jnp.all(attn_w[1, 0, 5:] < 1e-6))
    assert bool(jnp.all(jnp.abs(jnp.sum(attn_w, axis=-1) - 1.0) < 1e-2))
    print("KERNEL_OK")
</pallas_src>

<mosaic_0001>
module attributes {stable_mosaic.version = 11 : i64} {
  func.func @kv_project_kernel(%arg0: i32, %arg1: memref<16x32xbf16, #tpu.memory_space<vmem>>, %arg2: memref<32x64xbf16, #tpu.memory_space<vmem>>, %arg3: memref<1x64xf32, #tpu.memory_space<vmem>>, %arg4: memref<16x64xbf16, #tpu.memory_space<vmem>>) attributes {dimension_semantics = [#tpu.dimension_semantics<parallel>], iteration_bounds = array<i64: 1>, scalar_prefetch = 0 : i64, scratch_operands = 0 : i64, tpu.core_type = #tpu.core_type<tc>, window_params = [{transform_indices = @transform_0, window_bounds = array<i64: 16, 32>}, {pipeline_mode = #tpu.pipeline_mode<synchronous>, transform_indices = @transform_1, window_bounds = array<i64: 32, 64>}, {pipeline_mode = #tpu.pipeline_mode<synchronous>, transform_indices = @transform_2, window_bounds = array<i64: 1, 64>}, {transform_indices = @transform_3, window_bounds = array<i64: 16, 64>}]} {
    %c0 = arith.constant 0 : index
    %c0_0 = arith.constant 0 : index
    %0 = vector.load %arg1[%c0, %c0_0] : memref<16x32xbf16, #tpu.memory_space<vmem>>, vector<16x32xbf16>
    %c0_1 = arith.constant 0 : index
    %c0_2 = arith.constant 0 : index
    %1 = vector.load %arg2[%c0_1, %c0_2] : memref<32x64xbf16, #tpu.memory_space<vmem>>, vector<32x64xbf16>
    %cst = arith.constant dense<0.000000e+00> : vector<16x64xf32>
    %2 = tpu.matmul %0, %1, %cst {dimension_numbers = #tpu.dot_dimension_numbers<[1], [0], [0], [1], [0, 0, 1, 1], [], []>} : vector<16x32xbf16>, vector<32x64xbf16>, vector<16x64xf32> -> vector<16x64xf32>
    %c0_3 = arith.constant 0 : index
    %c0_4 = arith.constant 0 : index
    %3 = vector.load %arg3[%c0_3, %c0_4] : memref<1x64xf32, #tpu.memory_space<vmem>>, vector<1x64xf32>
    %4 = vector.broadcast %3 : vector<1x64xf32> to vector<16x64xf32>
    %5 = arith.addf %2, %4 : vector<16x64xf32>
    %6 = arith.truncf %5 : vector<16x64xf32> to vector<16x64xbf16>
    %c0_5 = arith.constant 0 : index
    %c0_6 = arith.constant 0 : index
    %7 = vector.load %arg4[%c0_5, %c0_6] : memref<16x64xbf16, #tpu.memory_space<vmem>>, vector<16x64xbf16>
    tpu.vector_store %arg4[%c0_5, %c0_6], %6 {strides = array<i32>} : memref<16x64xbf16, #tpu.memory_space<vmem>>, vector<16x64xbf16>,
    return
  }
  func.func @transform_0(%arg0: i32) -> (i32, i32) {
    %c0_i32 = arith.constant 0 : i32
    %c0_i32_0 = arith.constant 0 : i32
    return %arg0, %c0_i32 : i32, i32
  }
  func.func @transform_1(%arg0: i32) -> (i32, i32) {
    %c0_i32 = arith.constant 0 : i32
    %c0_i32_0 = arith.constant 0 : i32
    %c0_i32_1 = arith.constant 0 : i32
    return %c0_i32, %c0_i32_0 : i32, i32
  }
  func.func @transform_2(%arg0: i32) -> (i32, i32) {
    %c0_i32 = arith.constant 0 : i32
    %c0_i32_0 = arith.constant 0 : i32
    %c0_i32_1 = arith.constant 0 : i32
    return %c0_i32, %c0_i32_0 : i32, i32
  }
  func.func @transform_3(%arg0: i32) -> (i32, i32) {
    %c0_i32 = arith.constant 0 : i32
    %c0_i32_0 = arith.constant 0 : i32
    return %arg0, %c0_i32 : i32, i32
  }
}

</mosaic_0001>

<llo_original>
// kernel: tpu_custom_call.1
$region0: #{tpu_custom_call.1}
  #allocation0 [shape = 'u32[]', space=smem, size = 0x4, offset = 0x4, fixed_abs, tag = 'smem constant byte address 0x4 - core index']
  #allocation1 [shape = 'u32[72,128]{1,0:T(1,128)}', space=vmem, size = 0x9000, scoped, tag = 'internal scratch']
  %s0 = inlined_call_operand.hbm [shape: bf16[16,32], index: 0, kind: input, shape index: {}]
  %s1 = inlined_call_operand.hbm [shape: bf16[32,64], index: 1, kind: input, shape index: {}]
  %s2 = inlined_call_operand.vmem [shape: f32[1,64], index: 2, kind: input, shape index: {}]
  %s3 = inlined_call_operand.hbm [shape: bf16[16,64], index: 3, kind: output, shape index: {}]
  %s4 = sld [smem:[#allocation0]]
  $region30: #{tpu_custom_call.1} parent=0
    _
  %s6 = ssub.s32 1, %s4
  %s7 = scalar_select 0, %s6, %s4
  $region1: #{tpu_custom_call.1} parent=0
    #allocation2 [shape = 'u8[4096]{0}', space=vmem, size = 0x1000, scoped, tag = 'input window, operand 0, single buffered']
    #allocation3 [shape = 's32[1]{0}', space=sflag, size = 0x4, scoped, tag = 'scoped memory for tpu_custom_call.1']
    #allocation4 [shape = 's32[1]{0}', space=sflag, size = 0x4, scoped, tag = 'scoped memory for tpu_custom_call.1']
    #allocation5 [shape = 'u8[8192]{0}', space=vmem, size = 0x2000, scoped, tag = 'input window, operand 1, single buffered']
    #allocation6 [shape = 's32[1]{0}', space=sflag, size = 0x4, scoped, tag = 'scoped memory for tpu_custom_call.1']
    #allocation7 [shape = 'u8[4096]{0}', space=vmem, size = 0x1000, scoped, tag = 'output window, operand 0, single buffered']
    %8 = vsyncpa [#allocation3], 0
    %9 = vsyncpa [#allocation6], 0
    %10 = vsyncpa [#allocation4], 0
    // Predicated region
    $region2: #{tpu_custom_call.1} parent=1 // pred_check
      _
    $region3: #{tpu_custom_call.1} parent=1 // pred_check_branch
      %12 = sbr.rel (0) target = $region5
    $region4: #{tpu_custom_call.1} parent=1 // pred_region
      %14 = vsyncadd [#allocation3], 0
      %s15 = sshll.u32 %s0, 4
      %s16 = int_to_ptr.hbm [resolvable:$true] %s15
      %s17 = sshll.u32 [#allocation2], 4
      %s18 = int_to_ptr.vmem [resolvable:$true] %s17
      %23 = dma.hbm_to_vmem [thread:$0]  %s16, 128, %s18, [#allocation3], 64, 64, 4
    $region5: #{tpu_custom_call.1} parent=1 // pred_fallthru
      _
    // Predicated region
    $region6: #{tpu_custom_call.1} parent=1 // pred_check
      _
    $region7: #{tpu_custom_call.1} parent=1 // pred_check_branch
      %25 = sbr.rel (0) target = $region9
    $region8: #{tpu_custom_call.1} parent=1 // pred_region
      %27 = vsyncadd [#allocation6], 0
      %s28 = sshll.u32 %s1, 4
      %s29 = int_to_ptr.hbm [resolvable:$true] %s28
      %s30 = sshll.u32 [#allocation5], 4
      %s31 = int_to_ptr.vmem [resolvable:$true] %s30
      %36 = dma.hbm_to_vmem [thread:$0]  %s29, 256, %s31, [#allocation6], 64, 64, 4
    $region9: #{tpu_custom_call.1} parent=1 // pred_fallthru
      _
    // Predicated region
    $region10: #{tpu_custom_call.1} parent=1 // pred_check
      _
    $region11: #{tpu_custom_call.1} parent=1 // pred_check_branch
      %38 = sbr.rel (0) target = $region13
    $region12: #{tpu_custom_call.1} parent=1 // pred_region
      _
    $region13: #{tpu_custom_call.1} parent=1 // pred_fallthru
      _
    // Predicated region
    $region14: #{tpu_custom_call.1} parent=1 // pred_check
      _
    $region15: #{tpu_custom_call.1} parent=1 // pred_check_branch
      %40 = sbr.rel (0) target = $region17
    $region16: #{tpu_custom_call.1} parent=1 // pred_region
      %42 = dma.done [#allocation3], 128
    $region17: #{tpu_custom_call.1} parent=1 // pred_fallthru
      _
    // Predicated region
    $region18: #{tpu_custom_call.1} parent=1 // pred_check
      _
    $region19: #{tpu_custom_call.1} parent=1 // pred_check_branch
      %44 = sbr.rel (0) target = $region21
    $region20: #{tpu_custom_call.1} parent=1 // pred_region
      %46 = dma.done [#allocation6], 256
    $region21: #{tpu_custom_call.1} parent=1 // pred_fallthru
      _
    %v48 = vld [vmem:[#allocation2] sm:$0xf]
    %v49 = vld [vmem:[#allocation2 + $0x4] sm:$0xf]
    %v50 = vld [vmem:[#allocation5] sm:$0xf]
    %v51 = vld [vmem:[#allocation5 + $0x4] sm:$0xf]
    %v52 = vld [vmem:[#allocation5 + $0x8] sm:$0xf]
    %v53 = vld [vmem:[#allocation5 + $0xc] sm:$0xf]
    %v54 = vld [vmem:[%s2] sm:$0x1]
    %v56 = vperm.slane %v54, 0
    %v60 = vunpack.c.l.b16 %v48
    %v61 = vunpack.c.l.b16 %v49
    %v62 = vpack.c.b16 %v61, %v60
    %v67 = vunpack.c.l.b16 %v50
    %v68 = vunpack.c.l.b16 %v51
    %v69 = vunpack.c.l.b16 %v52
    %v70 = vunpack.c.l.b16 %v53
    %v71 = vpack.c.b16 %v68, %v67
    %v72 = vpack.c.b16 %v70, %v69
    %vm75 = vcmask 261120
    %v77 = vsel %vm75, %v62, 0
    %79 = vmatpush.bf16.msra.mxu0 0
    %80 = vmatpush.bf16.msra.mxu0 0
    %81 = vmatpush.bf16.msra.mxu0 0
    %82 = vmatpush.bf16.msra.mxu0 0
    %83 = vmatpush.bf16.msra.mxu0 0
    %84 = vmatpush.bf16.msra.mxu0 0
    %85 = vmatpush.bf16.msra.mxu0 %v72
    %86 = vmatpush.bf16.msra.mxu0 %v71
    %87 = vmatmul.bf16.gmra.mxu0 %v77
    %v88 = vpop.f32.mrf.mxu0
    %v89 = vadd.f32 %v56, %v88
    %v90 = vpop.f32.mrf.mxu0
    %v91 = vadd.f32 %v56, %v90
    %92 = vdwg.mxu0
    %v93 = vpack.c.bf16 %v89, %v89
    %v94 = vpack.c.bf16 %v91, %v91
    %vm95 = vcmask 519168
    %96 = vst.msk [vmem:[#allocation7] sm:$0xf] %vm95, %v93
    %97 = vst.msk [vmem:[#allocation7 + $0x4] sm:$0xf] %vm95, %v94
    // Predicated region
    $region22: #{tpu_custom_call.1} parent=1 // pred_check
      _
    $region23: #{tpu_custom_call.1} parent=1 // pred_check_branch
      %99 = sbr.rel (0) target = $region25
    $region24: #{tpu_custom_call.1} parent=1 // pred_region
      %101 = vsyncadd [#allocation4], 0
      %s102 = sshll.u32 [#allocation7], 4
      %s103 = int_to_ptr.vmem [resolvable:$true] %s102
      %s104 = sshll.u32 %s3, 4
      %s105 = int_to_ptr.hbm [resolvable:$true] %s104
      %110 = dma.vmem_to_hbm [thread:$0]  %s103, 128, %s105, [#allocation4], 64, 64, 4
    $region25: #{tpu_custom_call.1} parent=1 // pred_fallthru
      _
    // Predicated region
    $region26: #{tpu_custom_call.1} parent=1 // pred_check
      _
    $region27: #{tpu_custom_call.1} parent=1 // pred_check_branch
      %112 = sbr.rel (0) target = $region29
    $region28: #{tpu_custom_call.1} parent=1 // pred_region
      %114 = dma.done [#allocation4], 128
    $region29: #{tpu_custom_call.1} parent=1 // pred_fallthru
      _
    %115 = vsyncpa [#allocation3], 1
    %116 = vsyncpa [#allocation6], 1
    %117 = vsyncpa [#allocation4], 1

</llo_original>
